<compile_context>
chip_gen: v5e
topology: v5e:2x2
jax: 0.10.0
libtpu: 0.0.40
codegen_flags: <defaults>
</compile_context>

<pallas_src>
import functools

import jax
import jax.numpy as jnp
from jax import lax
from jax.experimental import pallas as pl
from jax.experimental.pallas import tpu as pltpu


def _round_up(n: int, m: int) -> int:
    return ((n + m - 1) // m) * m


# ----------------------------------------------------------------------------
# One-time parameter preparation (kept out of the per-call forward).
# ----------------------------------------------------------------------------
def prepare_params(p):
    H = p["whh_f"].shape[0]
    F = 2 * H
    OUT = p["w2"].shape[1]
    OPAD = _round_up(OUT, 128)                      # lane-dense output width

    # Block-diagonal hidden->hidden weight: one matmul per recurrence step.
    whh_blk = jnp.zeros((F, F), jnp.float32)
    whh_blk = whh_blk.at[:H, :H].set(p["whh_f"]).at[H:, H:].set(p["whh_b"])

    return {
        "wih_cat": jnp.concatenate([p["wih_f"], p["wih_b"]], axis=1),   # (I, 2H)
        "bih_cat": jnp.concatenate([p["b_f"], p["b_b"]], axis=1),       # (1, 2H)
        "whh_blk": whh_blk,                                             # (2H, 2H)
        "w1": p["w1"],                                                  # (2H, 2H)
        "b1": p["b1"],                                                  # (1, 2H)
        "w2p": jnp.zeros((F, OPAD), jnp.float32).at[:, :OUT].set(p["w2"]),
        "b2p": jnp.zeros((1, OPAD), jnp.float32).at[:, :OUT].set(p["b2"]),
        "alpha": p["alpha"].reshape(1).astype(jnp.float32),             # PReLU
    }


# ----------------------------------------------------------------------------
# Fused kernel: bidirectional tanh RNN + (Linear -> PReLU -> Linear)
# ----------------------------------------------------------------------------
def _fused_kernel(x_ref, wih_ref, bih_ref, whh_ref,
                  w1_ref, b1_ref, w2_ref, b2_ref, alpha_ref,
                  out_ref, *, T, B, H):
    F = 2 * H

    # 1) Hoisted input projection for BOTH directions in one GEMM.
    #    Kept as an in-kernel value (T*B x 2H is a couple of vregs) -> no
    #    scratch store / per-step masked reloads.
    p = (jnp.dot(x_ref[...], wih_ref[...], preferred_element_type=jnp.float32)
         + bih_ref[...])                                          # (T*B, 2H)

    # Lane mask picking the forward half (cols < H); hoisted out of the loop
    # (JAX does not CSE broadcast_in_dim).
    fwd_lane = lax.broadcasted_iota(jnp.int32, (B, F), 1) < H

    # 2) Merged bidirectional tanh recurrence: ONE matmul + ONE tanh per step.
    #    h = [h_f | h_b]; W_hh is block-diagonal, so the halves never mix.
    #    Backward direction walks time T-1-t directly (no reversed copies).
    whh = whh_ref[...]
    h = jnp.zeros((B, F), jnp.float32)
    h_steps = []
    for t in range(T):            # static unroll: T is small; use lax.fori_loop
        rf = t * B                # (carry=h, unroll=True) once T grows past ~16
        rb = (T - 1 - t) * B
        # [ p_fwd(t) | p_bwd(T-1-t) ] via a single lane select (VPU slot).
        p_step = jnp.where(fwd_lane, p[rf:rf + B, :], p[rb:rb + B, :])
        h = jnp.tanh(p_step + jnp.dot(h, whh, preferred_element_type=jnp.float32))
        h_steps.append(h)

    # 3) Re-pack to time order entirely in registers: packed row block r needs
    #    the forward half from step r and the backward half from step T-1-r.
    #    Lane selects + one concatenate -> no masked partial-sublane stores.
    rows = [jnp.where(fwd_lane, h_steps[r], h_steps[T - 1 - r]) for r in range(T)]
    hcat = jnp.concatenate(rows, axis=0)                          # (T*B, 2H)

    # 4) Classifier: Dropout(identity) -> Linear -> PReLU -> Dropout(identity)
    #    -> Linear, fused; output padded to 128 lanes so the store is lane-dense.
    z = (jnp.dot(hcat, w1_ref[...], preferred_element_type=jnp.float32)
         + b1_ref[...])
    a = alpha_ref[0]                                              # PReLU alpha (SMEM)
    z = jnp.where(z > 0, z, a * z)
    out = (jnp.dot(z, w2_ref[...], preferred_element_type=jnp.float32)
           + b2_ref[...])
    out_ref[...] = out.astype(out_ref.dtype)


def rnn_classifier_forward(x, prepped, output_dim):
    """x: [T, B, I] time-major (equal-length, sorted PackedSequence layout)."""
    T, B, I = x.shape
    F = prepped["whh_blk"].shape[0]
    H = F // 2
    OPAD = prepped["w2p"].shape[1]

    x_flat = x.reshape(T * B, I)

    vmem = pl.BlockSpec(memory_space=pltpu.MemorySpace.VMEM)
    smem = pl.BlockSpec(memory_space=pltpu.MemorySpace.SMEM)

    out_padded = pl.pallas_call(
        functools.partial(_fused_kernel, T=T, B=B, H=H),
        out_shape=jax.ShapeDtypeStruct((T * B, OPAD), jnp.float32),
        in_specs=[vmem] * 8 + [smem],
        out_specs=vmem,
    )(x_flat, prepped["wih_cat"], prepped["bih_cat"], prepped["whh_blk"],
      prepped["w1"], prepped["b1"], prepped["w2p"], prepped["b2p"],
      prepped["alpha"])

    return out_padded[:, :output_dim]          # == classifier(rnn(x)[0].data)


# ----------------------------------------------------------------------------
# Pure-JAX reference for a sanity check.
# ----------------------------------------------------------------------------
def reference_forward(x, p):
    T, B, _ = x.shape

    def scan_dir(xs, wih, whh, b):
        def step(h, xt):
            h = jnp.tanh(xt @ wih + h @ whh + b)
            return h, h
        h0 = jnp.zeros((B, whh.shape[0]), jnp.float32)
        _, hs = jax.lax.scan(step, h0, xs)
        return hs

    hf = scan_dir(x, p["wih_f"], p["whh_f"], p["b_f"])
    hb = scan_dir(x[::-1], p["wih_b"], p["whh_b"], p["b_b"])[::-1]
    h = jnp.concatenate([hf, hb], axis=-1).reshape(T * B, -1)
    z = h @ p["w1"] + p["b1"]
    z = jnp.where(z > 0, z, p["alpha"] * z)
    return z @ p["w2"] + p["b2"]


def init_params(key, input_size, hidden_size, output_dim):
    H, I, D = hidden_size, input_size, 2
    k_rnn = 1.0 / jnp.sqrt(H)
    k_lin1 = 1.0 / jnp.sqrt(H * D)
    keys = jax.random.split(key, 10)
    u = lambda k, shape, s: jax.random.uniform(k, shape, jnp.float32, -s, s)
    return {
        # forward direction (weights stored pre-transposed: x @ W)
        "wih_f": u(keys[0], (I, H), k_rnn),
        "whh_f": u(keys[1], (H, H), k_rnn),
        "b_f":   u(keys[2], (1, H), k_rnn),     # b_ih + b_hh folded together
        # backward direction
        "wih_b": u(keys[3], (I, H), k_rnn),
        "whh_b": u(keys[4], (H, H), k_rnn),
        "b_b":   u(keys[5], (1, H), k_rnn),
        # classifier
        "w1": u(keys[6], (H * D, H * D), k_lin1),
        "b1": u(keys[7], (1, H * D), k_lin1),
        "alpha": jnp.full((1, 1), 0.25, jnp.float32),   # nn.PReLU() default
        "w2": u(keys[8], (H * D, output_dim), k_lin1),
        "b2": u(keys[9], (1, output_dim), k_lin1),
    }


if __name__ == "__main__":
    T, B, I, H, OUT = 8, 2, 16, 32, 41
    key = jax.random.PRNGKey(0)
    kx, kp = jax.random.split(key)
    x = jax.random.normal(kx, (T, B, I), dtype=jnp.float32)   # time-major [T,B,I]
    params = init_params(kp, I, H, OUT)

    # One-time parameter prep (concat / pad / block-diag) outside the hot path.
    prepped = jax.tree_util.tree_map(jnp.asarray, prepare_params(params))

    forward = jax.jit(rnn_classifier_forward, static_argnums=2)
    scores = forward(x, prepped, OUT)
    scores = jax.block_until_ready(scores)

    assert scores.shape == (T * B, OUT), scores.shape
    assert bool(jnp.all(jnp.isfinite(scores)))

    ref = reference_forward(x, params)
    assert bool(jnp.allclose(scores, ref, atol=5e-2, rtol=5e-2))

    print("KERNEL_OK")
</pallas_src>

<mosaic_0001>
module attributes {stable_mosaic.version = 11 : i64} {
  func.func @_fused_kernel(%arg0: memref<16x16xf32, #tpu.memory_space<vmem>>, %arg1: memref<16x64xf32, #tpu.memory_space<vmem>>, %arg2: memref<1x64xf32, #tpu.memory_space<vmem>>, %arg3: memref<64x64xf32, #tpu.memory_space<vmem>>, %arg4: memref<64x64xf32, #tpu.memory_space<vmem>>, %arg5: memref<1x64xf32, #tpu.memory_space<vmem>>, %arg6: memref<64x128xf32, #tpu.memory_space<vmem>>, %arg7: memref<1x128xf32, #tpu.memory_space<vmem>>, %arg8: memref<1xf32, #tpu.memory_space<smem>>, %arg9: memref<16x128xf32, #tpu.memory_space<vmem>>) attributes {dimension_semantics = [], scalar_prefetch = 0 : i64, scratch_operands = 0 : i64, tpu.core_type = #tpu.core_type<tc>} {
    %c0 = arith.constant 0 : index
    %c0_0 = arith.constant 0 : index
    %0 = vector.load %arg0[%c0, %c0_0] : memref<16x16xf32, #tpu.memory_space<vmem>>, vector<16x16xf32>
    %c0_1 = arith.constant 0 : index
    %c0_2 = arith.constant 0 : index
    %1 = vector.load %arg1[%c0_1, %c0_2] : memref<16x64xf32, #tpu.memory_space<vmem>>, vector<16x64xf32>
    %cst = arith.constant dense<0.000000e+00> : vector<16x64xf32>
    %2 = tpu.matmul %0, %1, %cst {dimension_numbers = #tpu.dot_dimension_numbers<[1], [0], [0], [1], [0, 0, 1, 1], [], []>} : vector<16x16xf32>, vector<16x64xf32>, vector<16x64xf32> -> vector<16x64xf32>
    %c0_3 = arith.constant 0 : index
    %c0_4 = arith.constant 0 : index
    %3 = vector.load %arg2[%c0_3, %c0_4] : memref<1x64xf32, #tpu.memory_space<vmem>>, vector<1x64xf32>
    %4 = vector.broadcast %3 : vector<1x64xf32> to vector<16x64xf32>
    %5 = arith.addf %2, %4 : vector<16x64xf32>
    %6 = tpu.iota {dimensions = array<i32: 1>} : vector<2x64xi32>
    %c32_i32 = arith.constant 32 : i32
    %7 = vector.broadcast %c32_i32 : i32 to vector<2x64xi32>
    %8 = arith.cmpi slt, %6, %7 : vector<2x64xi32>
    %c0_5 = arith.constant 0 : index
    %c0_6 = arith.constant 0 : index
    %9 = vector.load %arg3[%c0_5, %c0_6] : memref<64x64xf32, #tpu.memory_space<vmem>>, vector<64x64xf32>
    %cst_7 = arith.constant 0.000000e+00 : f32
    %10 = vector.broadcast %cst_7 : f32 to vector<2x64xf32>
    %11 = vector.extract_strided_slice %5 {offsets = [0, 0], sizes = [2, 64], strides = [1, 1]} : vector<16x64xf32> to vector<2x64xf32>
    %12 = vector.extract_strided_slice %5 {offsets = [14, 0], sizes = [2, 64], strides = [1, 1]} : vector<16x64xf32> to vector<2x64xf32>
    %13 = arith.select %8, %11, %12 : vector<2x64xi1>, vector<2x64xf32>
    %cst_8 = arith.constant dense<0.000000e+00> : vector<2x64xf32>
    %14 = tpu.matmul %10, %9, %cst_8 {dimension_numbers = #tpu.dot_dimension_numbers<[1], [0], [0], [1], [0, 0, 1, 1], [], []>} : vector<2x64xf32>, vector<64x64xf32>, vector<2x64xf32> -> vector<2x64xf32>
    %15 = arith.addf %13, %14 : vector<2x64xf32>
    %16 = math.tanh %15 : vector<2x64xf32>
    %17 = vector.extract_strided_slice %5 {offsets = [2, 0], sizes = [2, 64], strides = [1, 1]} : vector<16x64xf32> to vector<2x64xf32>
    %18 = vector.extract_strided_slice %5 {offsets = [12, 0], sizes = [2, 64], strides = [1, 1]} : vector<16x64xf32> to vector<2x64xf32>
    %19 = arith.select %8, %17, %18 : vector<2x64xi1>, vector<2x64xf32>
    %cst_9 = arith.constant dense<0.000000e+00> : vector<2x64xf32>
    %20 = tpu.matmul %16, %9, %cst_9 {dimension_numbers = #tpu.dot_dimension_numbers<[1], [0], [0], [1], [0, 0, 1, 1], [], []>} : vector<2x64xf32>, vector<64x64xf32>, vector<2x64xf32> -> vector<2x64xf32>
    %21 = arith.addf %19, %20 : vector<2x64xf32>
    %22 = math.tanh %21 : vector<2x64xf32>
    %23 = vector.extract_strided_slice %5 {offsets = [4, 0], sizes = [2, 64], strides = [1, 1]} : vector<16x64xf32> to vector<2x64xf32>
    %24 = vector.extract_strided_slice %5 {offsets = [10, 0], sizes = [2, 64], strides = [1, 1]} : vector<16x64xf32> to vector<2x64xf32>
    %25 = arith.select %8, %23, %24 : vector<2x64xi1>, vector<2x64xf32>
    %cst_10 = arith.constant dense<0.000000e+00> : vector<2x64xf32>
    %26 = tpu.matmul %22, %9, %cst_10 {dimension_numbers = #tpu.dot_dimension_numbers<[1], [0], [0], [1], [0, 0, 1, 1], [], []>} : vector<2x64xf32>, vector<64x64xf32>, vector<2x64xf32> -> vector<2x64xf32>
    %27 = arith.addf %25, %26 : vector<2x64xf32>
    %28 = math.tanh %27 : vector<2x64xf32>
    %29 = vector.extract_strided_slice %5 {offsets = [6, 0], sizes = [2, 64], strides = [1, 1]} : vector<16x64xf32> to vector<2x64xf32>
    %30 = vector.extract_strided_slice %5 {offsets = [8, 0], sizes = [2, 64], strides = [1, 1]} : vector<16x64xf32> to vector<2x64xf32>
    %31 = arith.select %8, %29, %30 : vector<2x64xi1>, vector<2x64xf32>
    %cst_11 = arith.constant dense<0.000000e+00> : vector<2x64xf32>
    %32 = tpu.matmul %28, %9, %cst_11 {dimension_numbers = #tpu.dot_dimension_numbers<[1], [0], [0], [1], [0, 0, 1, 1], [], []>} : vector<2x64xf32>, vector<64x64xf32>, vector<2x64xf32> -> vector<2x64xf32>
    %33 = arith.addf %31, %32 : vector<2x64xf32>
    %34 = math.tanh %33 : vector<2x64xf32>
    %35 = vector.extract_strided_slice %5 {offsets = [8, 0], sizes = [2, 64], strides = [1, 1]} : vector<16x64xf32> to vector<2x64xf32>
    %36 = vector.extract_strided_slice %5 {offsets = [6, 0], sizes = [2, 64], strides = [1, 1]} : vector<16x64xf32> to vector<2x64xf32>
    %37 = arith.select %8, %35, %36 : vector<2x64xi1>, vector<2x64xf32>
    %cst_12 = arith.constant dense<0.000000e+00> : vector<2x64xf32>
    %38 = tpu.matmul %34, %9, %cst_12 {dimension_numbers = #tpu.dot_dimension_numbers<[1], [0], [0], [1], [0, 0, 1, 1], [], []>} : vector<2x64xf32>, vector<64x64xf32>, vector<2x64xf32> -> vector<2x64xf32>
    %39 = arith.addf %37, %38 : vector<2x64xf32>
    %40 = math.tanh %39 : vector<2x64xf32>
    %41 = vector.extract_strided_slice %5 {offsets = [10, 0], sizes = [2, 64], strides = [1, 1]} : vector<16x64xf32> to vector<2x64xf32>
    %42 = vector.extract_strided_slice %5 {offsets = [4, 0], sizes = [2, 64], strides = [1, 1]} : vector<16x64xf32> to vector<2x64xf32>
    %43 = arith.select %8, %41, %42 : vector<2x64xi1>, vector<2x64xf32>
    %cst_13 = arith.constant dense<0.000000e+00> : vector<2x64xf32>
    %44 = tpu.matmul %40, %9, %cst_13 {dimension_numbers = #tpu.dot_dimension_numbers<[1], [0], [0], [1], [0, 0, 1, 1], [], []>} : vector<2x64xf32>, vector<64x64xf32>, vector<2x64xf32> -> vector<2x64xf32>
    %45 = arith.addf %43, %44 : vector<2x64xf32>
    %46 = math.tanh %45 : vector<2x64xf32>
    %47 = vector.extract_strided_slice %5 {offsets = [12, 0], sizes = [2, 64], strides = [1, 1]} : vector<16x64xf32> to vector<2x64xf32>
    %48 = vector.extract_strided_slice %5 {offsets = [2, 0], sizes = [2, 64], strides = [1, 1]} : vector<16x64xf32> to vector<2x64xf32>
    %49 = arith.select %8, %47, %48 : vector<2x64xi1>, vector<2x64xf32>
    %cst_14 = arith.constant dense<0.000000e+00> : vector<2x64xf32>
    %50 = tpu.matmul %46, %9, %cst_14 {dimension_numbers = #tpu.dot_dimension_numbers<[1], [0], [0], [1], [0, 0, 1, 1], [], []>} : vector<2x64xf32>, vector<64x64xf32>, vector<2x64xf32> -> vector<2x64xf32>
    %51 = arith.addf %49, %50 : vector<2x64xf32>
    %52 = math.tanh %51 : vector<2x64xf32>
    %53 = vector.extract_strided_slice %5 {offsets = [14, 0], sizes = [2, 64], strides = [1, 1]} : vector<16x64xf32> to vector<2x64xf32>
    %54 = vector.extract_strided_slice %5 {offsets = [0, 0], sizes = [2, 64], strides = [1, 1]} : vector<16x64xf32> to vector<2x64xf32>
    %55 = arith.select %8, %53, %54 : vector<2x64xi1>, vector<2x64xf32>
    %cst_15 = arith.constant dense<0.000000e+00> : vector<2x64xf32>
    %56 = tpu.matmul %52, %9, %cst_15 {dimension_numbers = #tpu.dot_dimension_numbers<[1], [0], [0], [1], [0, 0, 1, 1], [], []>} : vector<2x64xf32>, vector<64x64xf32>, vector<2x64xf32> -> vector<2x64xf32>
    %57 = arith.addf %55, %56 : vector<2x64xf32>
    %58 = math.tanh %57 : vector<2x64xf32>
    %59 = arith.select %8, %16, %58 : vector<2x64xi1>, vector<2x64xf32>
    %60 = arith.select %8, %22, %52 : vector<2x64xi1>, vector<2x64xf32>
    %61 = arith.select %8, %28, %46 : vector<2x64xi1>, vector<2x64xf32>
    %62 = arith.select %8, %34, %40 : vector<2x64xi1>, vector<2x64xf32>
    %63 = arith.select %8, %40, %34 : vector<2x64xi1>, vector<2x64xf32>
    %64 = arith.select %8, %46, %28 : vector<2x64xi1>, vector<2x64xf32>
    %65 = arith.select %8, %52, %22 : vector<2x64xi1>, vector<2x64xf32>
    %66 = arith.select %8, %58, %16 : vector<2x64xi1>, vector<2x64xf32>
    %67 = tpu.concatenate %59, %60, %61, %62, %63, %64, %65, %66 in 0 : vector<2x64xf32>, vector<2x64xf32>, vector<2x64xf32>, vector<2x64xf32>, vector<2x64xf32>, vector<2x64xf32>, vector<2x64xf32>, vector<2x64xf32> -> vector<16x64xf32>
    %c0_16 = arith.constant 0 : index
    %c0_17 = arith.constant 0 : index
    %68 = vector.load %arg4[%c0_16, %c0_17] : memref<64x64xf32, #tpu.memory_space<vmem>>, vector<64x64xf32>
    %cst_18 = arith.constant dense<0.000000e+00> : vector<16x64xf32>
    %69 = tpu.matmul %67, %68, %cst_18 {dimension_numbers = #tpu.dot_dimension_numbers<[1], [0], [0], [1], [0, 0, 1, 1], [], []>} : vector<16x64xf32>, vector<64x64xf32>, vector<16x64xf32> -> vector<16x64xf32>
    %c0_19 = arith.constant 0 : index
    %c0_20 = arith.constant 0 : index
    %70 = vector.load %arg5[%c0_19, %c0_20] : memref<1x64xf32, #tpu.memory_space<vmem>>, vector<1x64xf32>
    %71 = vector.broadcast %70 : vector<1x64xf32> to vector<16x64xf32>
    %72 = arith.addf %69, %71 : vector<16x64xf32>
    %c0_21 = arith.constant 0 : index
    %73 = memref.load %arg8[%c0_21] : memref<1xf32, #tpu.memory_space<smem>>
    %cst_22 = arith.constant 0.000000e+00 : f32
    %74 = vector.broadcast %cst_22 : f32 to vector<16x64xf32>
    %75 = arith.cmpf ogt, %72, %74 : vector<16x64xf32>
    %76 = vector.broadcast %73 : f32 to vector<16x64xf32>
    %77 = arith.mulf %76, %72 : vector<16x64xf32>
    %78 = arith.select %75, %72, %77 : vector<16x64xi1>, vector<16x64xf32>
    %c0_23 = arith.constant 0 : index
    %c0_24 = arith.constant 0 : index
    %79 = vector.load %arg6[%c0_23, %c0_24] : memref<64x128xf32, #tpu.memory_space<vmem>>, vector<64x128xf32>
    %cst_25 = arith.constant dense<0.000000e+00> : vector<16x128xf32>
    %80 = tpu.matmul %78, %79, %cst_25 {dimension_numbers = #tpu.dot_dimension_numbers<[1], [0], [0], [1], [0, 0, 1, 1], [], []>} : vector<16x64xf32>, vector<64x128xf32>, vector<16x128xf32> -> vector<16x128xf32>
    %c0_26 = arith.constant 0 : index
    %c0_27 = arith.constant 0 : index
    %81 = vector.load %arg7[%c0_26, %c0_27] : memref<1x128xf32, #tpu.memory_space<vmem>>, vector<1x128xf32>
    %82 = vector.broadcast %81 : vector<1x128xf32> to vector<16x128xf32>
    %83 = arith.addf %80, %82 : vector<16x128xf32>
    %c0_28 = arith.constant 0 : index
    %c0_29 = arith.constant 0 : index
    %84 = vector.load %arg9[%c0_28, %c0_29] : memref<16x128xf32, #tpu.memory_space<vmem>>, vector<16x128xf32>
    tpu.vector_store %arg9[%c0_28, %c0_29], %83 {strides = array<i32>} : memref<16x128xf32, #tpu.memory_space<vmem>>, vector<16x128xf32>,
    return
  }
}

</mosaic_0001>

<llo_original>
// kernel: rnn_classifier_forward.1
$region0: #{rnn_classifier_forward.1}
  #allocation0 [shape = 'u32[]', space=smem, size = 0x4, offset = 0x4, fixed_abs, tag = 'smem constant byte address 0x4 - core index']
  #allocation1 [shape = 'u32[72,128]{1,0:T(1,128)}', space=vmem, size = 0x9000, scoped, tag = 'internal scratch']
  #allocation2 [shape = 'f32[1]{0:T(128)S(6)}', space=smem, size = 0x200, scoped, tag = 'scoped memory for rnn_classifier_forward.1']
  %s0 = inlined_call_operand.hbm [shape: f32[16,16], index: 0, kind: input, shape index: {}]
  %s1 = inlined_call_operand.hbm [shape: f32[16,64], index: 1, kind: input, shape index: {}]
  %s2 = inlined_call_operand.vmem [shape: f32[1,64], index: 2, kind: input, shape index: {}]
  %s3 = inlined_call_operand.hbm [shape: f32[64,64], index: 3, kind: input, shape index: {}]
  %s4 = inlined_call_operand.hbm [shape: f32[64,64], index: 4, kind: input, shape index: {}]
  %s5 = inlined_call_operand.vmem [shape: f32[1,64], index: 5, kind: input, shape index: {}]
  %s6 = inlined_call_operand.hbm [shape: f32[64,128], index: 6, kind: input, shape index: {}]
  %s7 = inlined_call_operand.vmem [shape: f32[1,128], index: 7, kind: input, shape index: {}]
  %s8 = inlined_call_operand.<no memory space> [shape: f32[1], index: 8, kind: input, shape index: {}]
  %s9 = inlined_call_operand.hbm [shape: f32[16,128], index: 9, kind: output, shape index: {}]
  %s10 = sld [smem:[#allocation0]]
  $region66: #{rnn_classifier_forward.1} parent=0
    _
  %s12 = ssub.s32 1, %s10
  %s13 = scalar_select 0, %s12, %s10
  %14 = sst [smem:[#allocation2]] %s8
  $region1: #{rnn_classifier_forward.1} parent=0
    #allocation3 [shape = 'u8[8192]{0}', space=vmem, size = 0x2000, scoped, tag = 'input window, operand 0, single buffered']
    #allocation4 [shape = 's32[1]{0}', space=sflag, size = 0x4, scoped, tag = 'scoped memory for rnn_classifier_forward.1']
    #allocation5 [shape = 's32[1]{0}', space=sflag, size = 0x4, scoped, tag = 'scoped memory for rnn_classifier_forward.1']
    #allocation6 [shape = 'u8[8192]{0}', space=vmem, size = 0x2000, scoped, tag = 'input window, operand 1, single buffered']
    #allocation7 [shape = 's32[1]{0}', space=sflag, size = 0x4, scoped, tag = 'scoped memory for rnn_classifier_forward.1']
    #allocation8 [shape = 'u8[32768]{0}', space=vmem, size = 0x8000, scoped, tag = 'input window, operand 3, single buffered']
    #allocation9 [shape = 'u8[32768]{0}', space=vmem, size = 0x8000, scoped, tag = 'input window, operand 4, single buffered']
    #allocation10 [shape = 's32[1]{0}', space=sflag, size = 0x4, scoped, tag = 'scoped memory for rnn_classifier_forward.1']
    #allocation11 [shape = 'u8[32768]{0}', space=vmem, size = 0x8000, scoped, tag = 'input window, operand 6, single buffered']
    #allocation12 [shape = 'u8[8192]{0}', space=vmem, size = 0x2000, scoped, tag = 'output window, operand 0, single buffered']
    %15 = vsyncpa [#allocation4], 0
    %16 = vsyncpa [#allocation7], 0
    %17 = vsyncpa [#allocation10], 0
    %18 = vsyncpa [#allocation5], 0
    // Predicated region
    $region2: #{rnn_classifier_forward.1} parent=1 // pred_check
      _
    $region3: #{rnn_classifier_forward.1} parent=1 // pred_check_branch
      %20 = sbr.rel (0) target = $region5
    $region4: #{rnn_classifier_forward.1} parent=1 // pred_region
      %22 = vsyncadd [#allocation4], 0
      %s23 = sshll.u32 %s0, 4
      %s24 = int_to_ptr.hbm [resolvable:$true] %s23
      %s25 = sshll.u32 [#allocation3], 4
      %s26 = int_to_ptr.vmem [resolvable:$true] %s25
      %31 = dma.hbm_to_vmem [thread:$0]  %s24, 256, %s26, [#allocation4], 128, 128, 8
    $region5: #{rnn_classifier_forward.1} parent=1 // pred_fallthru
      _
    // Predicated region
    $region6: #{rnn_classifier_forward.1} parent=1 // pred_check
      _
    $region7: #{rnn_classifier_forward.1} parent=1 // pred_check_branch
      %33 = sbr.rel (0) target = $region9
    $region8: #{rnn_classifier_forward.1} parent=1 // pred_region
      %35 = vsyncadd [#allocation7], 0
      %s36 = sshll.u32 %s1, 4
      %s37 = int_to_ptr.hbm [resolvable:$true] %s36
      %s38 = sshll.u32 [#allocation6], 4
      %s39 = int_to_ptr.vmem [resolvable:$true] %s38
      %44 = dma.hbm_to_vmem [thread:$0]  %s37, 256, %s39, [#allocation7], 128, 128, 8
    $region9: #{rnn_classifier_forward.1} parent=1 // pred_fallthru
      _
    // Predicated region
    $region10: #{rnn_classifier_forward.1} parent=1 // pred_check
      _
    $region11: #{rnn_classifier_forward.1} parent=1 // pred_check_branch
      %46 = sbr.rel (0) target = $region13
    $region12: #{rnn_classifier_forward.1} parent=1 // pred_region
      _
    $region13: #{rnn_classifier_forward.1} parent=1 // pred_fallthru
      _
    // Predicated region
    $region14: #{rnn_classifier_forward.1} parent=1 // pred_check
      _
    $region15: #{rnn_classifier_forward.1} parent=1 // pred_check_branch
      %48 = sbr.rel (0) target = $region17
    $region16: #{rnn_classifier_forward.1} parent=1 // pred_region
      %50 = vsyncadd [#allocation7], 0
      %s51 = sshll.u32 %s3, 4
      %s52 = int_to_ptr.hbm [resolvable:$true] %s51
      %s53 = sshll.u32 [#allocation8], 4
      %s54 = int_to_ptr.vmem [resolvable:$true] %s53
      %59 = dma.hbm_to_vmem [thread:$0]  %s52, 1024, %s54, [#allocation7], 128, 128, 8
    $region17: #{rnn_classifier_forward.1} parent=1 // pred_fallthru
      _
    // Predicated region
    $region18: #{rnn_classifier_forward.1} parent=1 // pred_check
      _
    $region19: #{rnn_classifier_forward.1} parent=1 // pred_check_branch
      %61 = sbr.rel (0) target = $region21
    $region20: #{rnn_classifier_forward.1} parent=1 // pred_region
      %63 = vsyncadd [#allocation10], 0
      %s64 = sshll.u32 %s4, 4
      %s65 = int_to_ptr.hbm [resolvable:$true] %s64
      %s66 = sshll.u32 [#allocation9], 4
      %s67 = int_to_ptr.vmem [resolvable:$true] %s66
      %72 = dma.hbm_to_vmem [thread:$0]  %s65, 1024, %s67, [#allocation10], 128, 128, 8
    $region21: #{rnn_classifier_forward.1} parent=1 // pred_fallthru
      _
    // Predicated region
    $region22: #{rnn_classifier_forward.1} parent=1 // pred_check
      _
    $region23: #{rnn_classifier_forward.1} parent=1 // pred_check_branch
      %74 = sbr.rel (0) target = $region25
    $region24: #{rnn_classifier_forward.1} parent=1 // pred_region
      _
    $region25: #{rnn_classifier_forward.1} parent=1 // pred_fallthru
      _
    // Predicated region
    $region26: #{rnn_classifier_forward.1} parent=1 // pred_check
      _
    $region27: #{rnn_classifier_forward.1} parent=1 // pred_check_branch
      %76 = sbr.rel (0) target = $region29
    $region28: #{rnn_classifier_forward.1} parent=1 // pred_region
      %78 = vsyncadd [#allocation10], 0
      %s79 = sshll.u32 %s6, 4
      %s80 = int_to_ptr.hbm [resolvable:$true] %s79
      %s81 = sshll.u32 [#allocation11], 4
      %s82 = int_to_ptr.vmem [resolvable:$true] %s81
      %87 = dma.hbm_to_vmem [thread:$0]  %s80, 1024, %s82, [#allocation10], 128, 128, 8
    $region29: #{rnn_classifier_forward.1} parent=1 // pred_fallthru
      _
    // Predicated region
    $region30: #{rnn_classifier_forward.1} parent=1 // pred_check
      _
    $region31: #{rnn_classifier_forward.1} parent=1 // pred_check_branch
      %89 = sbr.rel (0) target = $region33
    $region32: #{rnn_classifier_forward.1} parent=1 // pred_region
      _
    $region33: #{rnn_classifier_forward.1} parent=1 // pred_fallthru
      _
    // Predicated region
    $region34: #{rnn_classifier_forward.1} parent=1 // pred_check
      _
    $region35: #{rnn_classifier_forward.1} parent=1 // pred_check_branch
      %91 = sbr.rel (0) target = $region37
    $region36: #{rnn_classifier_forward.1} parent=1 // pred_region
      _
    $region37: #{rnn_classifier_forward.1} parent=1 // pred_fallthru
      _
    // Predicated region
    $region38: #{rnn_classifier_forward.1} parent=1 // pred_check
      _
    $region39: #{rnn_classifier_forward.1} parent=1 // pred_check_branch
      %93 = sbr.rel (0) target = $region41
    $region40: #{rnn_classifier_forward.1} parent=1 // pred_region
      %95 = dma.done [#allocation4], 256
    $region41: #{rnn_classifier_forward.1} parent=1 // pred_fallthru
      _
    // Predicated region
    $region42: #{rnn_classifier_forward.1} parent=1 // pred_check
      _
    $region43: #{rnn_classifier_forward.1} parent=1 // pred_check_branch
      %97 = sbr.rel (0) target = $region45
    $region44: #{rnn_classifier_forward.1} parent=1 // pred_region
      %99 = dma.done [#allocation7], 256
    $region45: #{rnn_classifier_forward.1} parent=1 // pred_fallthru
      _
    // Predicated region
    $region46: #{rnn_classifier_forward.1} parent=1 // pred_check
      _
    $region47: #{rnn_classifier_forward.1} parent=1 // pred_check_branch
      %101 = sbr.rel (0) target = $region49
    $region48: #{rnn_classifier_forward.1} parent=1 // pred_region
      %103 = dma.done [#allocation7], 1024
    $region49: #{rnn_classifier_forward.1} parent=1 // pred_fallthru
      _
    // Predicated region
    $region50: #{rnn_classifier_forward.1} parent=1 // pred_check
      _
    $region51: #{rnn_classifier_forward.1} parent=1 // pred_check_branch
      %105 = sbr.rel (0) target = $region53
    $region52: #{rnn_classifier_forward.1} parent=1 // pred_region
      %107 = dma.done [#allocation10], 1024
    $region53: #{rnn_classifier_forward.1} parent=1 // pred_fallthru
      _
    // Predicated region
    $region54: #{rnn_classifier_forward.1} parent=1 // pred_check
      _
    $region55: #{rnn_classifier_forward.1} parent=1 // pred_check_branch
      %109 = sbr.rel (0) target = $region57
    $region56: #{rnn_classifier_forward.1} parent=1 // pred_region
      %111 = dma.done [#allocation10], 1024
    $region57: #{rnn_classifier_forward.1} parent=1 // pred_fallthru
      _
    %v112 = vld [vmem:[#allocation3] sm:$0xff]
    %v113 = vld [vmem:[#allocation3 + $0x8] sm:$0xff]
    %v114 = vld [vmem:[#allocation6] sm:$0xff]
    %v115 = vld [vmem:[#allocation6 + $0x8] sm:$0xff]
    %v116 = vld [vmem:[%s2] sm:$0x1]
    %v118 = vperm.slane %v116, 0
    %vm120 = vcmask 130048
    %v122 = vsel %vm120, %v112, 0
    %v125 = vsel %vm120, %v113, 0
    %127 = vmatpush.msra.mxu0 0.0
    %128 = vmatpush.msra.mxu0 0.0
    %129 = vmatpush.msra.mxu0 0.0
    %130 = vmatpush.msra.mxu0 0.0
    %131 = vmatpush.msra.mxu0 0.0
    %132 = vmatpush.msra.mxu0 0.0
    %133 = vmatpush.msra.mxu0 0.0
    %134 = vmatpush.msra.mxu0 0.0
    %135 = vmatpush.msra.mxu0 0.0
    %136 = vmatpush.msra.mxu0 0.0
    %137 = vmatpush.msra.mxu0 0.0
    %138 = vmatpush.msra.mxu0 0.0
    %139 = vmatpush.msra.mxu0 0.0
    %140 = vmatpush.msra.mxu0 0.0
    %141 = vmatpush.msra.mxu0 %v115
    %142 = vmatpush.msra.mxu0 %v114
    %143 = vmatmul.f32.gmra.mxu0 %v122
    %v144 = vpop.f32.mrf.mxu0
    %v145 = vadd.f32 %v118, %v144
    %146 = vmatmul.f32.gmra.mxu0 %v125
    %v147 = vpop.f32.mrf.mxu0
    %v148 = vadd.f32 %v118, %v147
    %149 = vdwg.mxu0
    %v150 = vlaneseq
    %v151 = vand.u32 %v150, 127
    %vm152 = vcmp.lt.s32.totalorder %v151, 32
    %v153 = vld [vmem:[#allocation8] sm:$0xff]
    %v154 = vld [vmem:[#allocation8 + $0x8] sm:$0xff]
    %v155 = vld [vmem:[#allocation8 + $0x10] sm:$0xff]
    %v156 = vld [vmem:[#allocation8 + $0x18] sm:$0xff]
    %v157 = vld [vmem:[#allocation8 + $0x20] sm:$0xff]
    %v158 = vld [vmem:[#allocation8 + $0x28] sm:$0xff]
    %v159 = vld [vmem:[#allocation8 + $0x30] sm:$0xff]
    %v160 = vld [vmem:[#allocation8 + $0x38] sm:$0xff]
    %v162 = vrot.slane %v148, 6
    %v164 = vsel %vm152, %v145, %v162
    %vm165 = vcmask 523264
    %v167 = vsel %vm165, 0.0, 0
    %169 = vmatpush.msra.mxu0 0.0
    %170 = vmatpush.msra.mxu0 0.0
    %171 = vmatpush.msra.mxu0 0.0
    %172 = vmatpush.msra.mxu0 0.0
    %173 = vmatpush.msra.mxu0 0.0
    %174 = vmatpush.msra.mxu0 0.0
    %175 = vmatpush.msra.mxu0 0.0
    %176 = vmatpush.msra.mxu0 0.0
    %177 = vmatpush.msra.mxu0 %v160
    %178 = vmatpush.msra.mxu0 %v159
    %179 = vmatpush.msra.mxu0 %v158
    %180 = vmatpush.msra.mxu0 %v157
    %181 = vmatpush.msra.mxu0 %v156
    %182 = vmatpush.msra.mxu0 %v155
    %183 = vmatpush.msra.mxu0 %v154
    %184 = vmatpush.msra.mxu0 %v153
    %185 = vmatmul.f32.gmra.mxu0 %v167
    %v186 = vpop.f32.mrf.mxu0
    %v187 = vadd.f32 0.0, %v186
    %188 = vdwg.mxu0
    %v189 = vadd.f32 %v164, %v187
    %v190 = vtanh.pop %v189
    %v191 = vrot.slane %v148, 2
    %v193 = vsel %vm152, %v145, %v191
    %v195 = vsel %vm165, %v190, 0
    %197 = vmatpush.msra.mxu0 0.0
    %198 = vmatpush.msra.mxu0 0.0
    %199 = vmatpush.msra.mxu0 0.0
    %200 = vmatpush.msra.mxu0 0.0
    %201 = vmatpush.msra.mxu0 0.0
    %202 = vmatpush.msra.mxu0 0.0
    %203 = vmatpush.msra.mxu0 0.0
    %204 = vmatpush.msra.mxu0 0.0
    %205 = vmatpush.msra.mxu0 %v160
    %206 = vmatpush.msra.mxu0 %v159
    %207 = vmatpush.msra.mxu0 %v158
    %208 = vmatpush.msra.mxu0 %v157
    %209 = vmatpush.msra.mxu0 %v156
    %210 = vmatpush.msra.mxu0 %v155
    %211 = vmatpush.msra.mxu0 %v154
    %212 = vmatpush.msra.mxu0 %v153
    %213 = vmatmul.f32.gmra.mxu0 %v195
    %v214 = vpop.f32.mrf.mxu0
    %v215 = vadd.f32 0.0, %v214
    %216 = vdwg.mxu0
    %v218 = vrot.slane %v215, 6
    %v220 = vadd.f32 %v193, %v218
    %v221 = vtanh.pop %v220
    %v223 = vrot.slane %v221, 2
    %v224 = vsel %vm165, %v223, 0
    %226 = vmatpush.msra.mxu0 0.0
    %227 = vmatpush.msra.mxu0 0.0
    %228 = vmatpush.msra.mxu0 0.0
    %229 = vmatpush.msra.mxu0 0.0
    %230 = vmatpush.msra.mxu0 0.0
    %231 = vmatpush.msra.mxu0 0.0
    %232 = vmatpush.msra.mxu0 0.0
    %233 = vmatpush.msra.mxu0 0.0
    %234 = vmatpush.msra.mxu0 %v160
    %235 = vmatpush.msra.mxu0 %v159
    %236 = vmatpush.msra.mxu0 %v158
    %237 = vmatpush.msra.mxu0 %v157
    %238 = vmatpush.msra.mxu0 %v156
    %239 = vmatpush.msra.mxu0 %v155
    %240 = vmatpush.msra.mxu0 %v154
    %241 = vmatpush.msra.mxu0 %v153
    %242 = vmatmul.f32.gmra.mxu0 %v224
    %v243 = vpop.f32.mrf.mxu0
    %v244 = vadd.f32 0.0, %v243
    %245 = vdwg.mxu0
    %v247 = vrot.slane %v244, 4
    %v249 = vadd.f32 %v164, %v247
    %v250 = vtanh.pop %v249
    %v252 = vrot.slane %v250, 4
    %v253 = vsel %vm165, %v252, 0
    %255 = vmatpush.msra.mxu0 0.0
    %256 = vmatpush.msra.mxu0 0.0
    %257 = vmatpush.msra.mxu0 0.0
    %258 = vmatpush.msra.mxu0 0.0
    %259 = vmatpush.msra.mxu0 0.0
    %260 = vmatpush.msra.mxu0 0.0
    %261 = vmatpush.msra.mxu0 0.0
    %262 = vmatpush.msra.mxu0 0.0
    %263 = vmatpush.msra.mxu0 %v160
    %264 = vmatpush.msra.mxu0 %v159
    %265 = vmatpush.msra.mxu0 %v158
    %266 = vmatpush.msra.mxu0 %v157
    %267 = vmatpush.msra.mxu0 %v156
    %268 = vmatpush.msra.mxu0 %v155
    %269 = vmatpush.msra.mxu0 %v154
    %270 = vmatpush.msra.mxu0 %v153
    %271 = vmatmul.f32.gmra.mxu0 %v253
    %v272 = vpop.f32.mrf.mxu0
    %v273 = vadd.f32 0.0, %v272
    %274 = vdwg.mxu0
    %v276 = vrot.slane %v273, 2
    %v278 = vadd.f32 %v193, %v276
    %v279 = vtanh.pop %v278
    %v281 = vrot.slane %v145, 6
    %v283 = vsel %vm152, %v148, %v281
    %v285 = vrot.slane %v279, 6
    %v286 = vsel %vm165, %v285, 0
    %288 = vmatpush.msra.mxu0 0.0
    %289 = vmatpush.msra.mxu0 0.0
    %290 = vmatpush.msra.mxu0 0.0
    %291 = vmatpush.msra.mxu0 0.0
    %292 = vmatpush.msra.mxu0 0.0
    %293 = vmatpush.msra.mxu0 0.0
    %294 = vmatpush.msra.mxu0 0.0
    %295 = vmatpush.msra.mxu0 0.0
    %296 = vmatpush.msra.mxu0 %v160
    %297 = vmatpush.msra.mxu0 %v159
    %298 = vmatpush.msra.mxu0 %v158
    %299 = vmatpush.msra.mxu0 %v157
    %300 = vmatpush.msra.mxu0 %v156
    %301 = vmatpush.msra.mxu0 %v155
    %302 = vmatpush.msra.mxu0 %v154
    %303 = vmatpush.msra.mxu0 %v153
    %304 = vmatmul.f32.gmra.mxu0 %v286
    %v305 = vpop.f32.mrf.mxu0
    %v306 = vadd.f32 0.0, %v305
    %307 = vdwg.mxu0
    %v308 = vadd.f32 %v283, %v306
    %v309 = vtanh.pop %v308
    %v310 = vrot.slane %v145, 2
    %v312 = vsel %vm152, %v148, %v310
    %v314 = vsel %vm165, %v309, 0
    %316 = vmatpush.msra.mxu0 0.0
    %317 = vmatpush.msra.mxu0 0.0
    %318 = vmatpush.msra.mxu0 0.0
    %319 = vmatpush.msra.mxu0 0.0
    %320 = vmatpush.msra.mxu0 0.0
    %321 = vmatpush.msra.mxu0 0.0
    %322 = vmatpush.msra.mxu0 0.0
    %323 = vmatpush.msra.mxu0 0.0
    %324 = vmatpush.msra.mxu0 %v160
    %325 = vmatpush.msra.mxu0 %v159
    %326 = vmatpush.msra.mxu0 %v158
    %327 = vmatpush.msra.mxu0 %v157
    %328 = vmatpush.msra.mxu0 %v156
    %329 = vmatpush.msra.mxu0 %v155
    %330 = vmatpush.msra.mxu0 %v154
    %331 = vmatpush.msra.mxu0 %v153
    %332 = vmatmul.f32.gmra.mxu0 %v314
    %v333 = vpop.f32.mrf.mxu0
    %v334 = vadd.f32 0.0, %v333
    %335 = vdwg.mxu0
    %v337 = vrot.slane %v334, 6
    %v339 = vadd.f32 %v312, %v337
    %v340 = vtanh.pop %v339
    %v342 = vrot.slane %v340, 2
    %v343 = vsel %vm165, %v342, 0
    %345 = vmatpush.msra.mxu0 0.0
    %346 = vmatpush.msra.mxu0 0.0
    %347 = vmatpush.msra.mxu0 0.0
    %348 = vmatpush.msra.mxu0 0.0
    %349 = vmatpush.msra.mxu0 0.0
    %350 = vmatpush.msra.mxu0 0.0
    %351 = vmatpush.msra.mxu0 0.0
    %352 = vmatpush.msra.mxu0 0.0
    %353 = vmatpush.msra.mxu0 %v160
    %354 = vmatpush.msra.mxu0 %v159
    %355 = vmatpush.msra.mxu0 %v158
    %356 = vmatpush.msra.mxu0 %v157
    %357 = vmatpush.msra.mxu0 %v156
    %358 = vmatpush.msra.mxu0 %v155
    %359 = vmatpush.msra.mxu0 %v154
    %360 = vmatpush.msra.mxu0 %v153
    %361 = vmatmul.f32.gmra.mxu0 %v343
    %v362 = vpop.f32.mrf.mxu0
    %v363 = vadd.f32 0.0, %v362
    %364 = vdwg.mxu0
    %v366 = vrot.slane %v363, 4
    %v368 = vadd.f32 %v283, %v366
    %v369 = vtanh.pop %v368
    %v371 = vrot.slane %v369, 4
    %v372 = vsel %vm165, %v371, 0
    %374 = vmatpush.msra.mxu0 0.0
    %375 = vmatpush.msra.mxu0 0.0
    %376 = vmatpush.msra.mxu0 0.0
    %377 = vmatpush.msra.mxu0 0.0
    %378 = vmatpush.msra.mxu0 0.0
    %379 = vmatpush.msra.mxu0 0.0
    %380 = vmatpush.msra.mxu0 0.0
    %381 = vmatpush.msra.mxu0 0.0
    %382 = vmatpush.msra.mxu0 %v160
    %383 = vmatpush.msra.mxu0 %v159
    %384 = vmatpush.msra.mxu0 %v158
    %385 = vmatpush.msra.mxu0 %v157
    %386 = vmatpush.msra.mxu0 %v156
    %387 = vmatpush.msra.mxu0 %v155
    %388 = vmatpush.msra.mxu0 %v154
    %389 = vmatpush.msra.mxu0 %v153
    %390 = vmatmul.f32.gmra.mxu0 %v372
    %v391 = vpop.f32.mrf.mxu0
    %v392 = vadd.f32 0.0, %v391
    %393 = vdwg.mxu0
    %v395 = vrot.slane %v392, 2
    %v397 = vadd.f32 %v312, %v395
    %v398 = vtanh.pop %v397
    %v400 = vrot.slane %v398, 6
    %v402 = vsel %vm152, %v190, %v400
    %v403 = vrot.slane %v369, 2
    %v405 = vsel %vm152, %v221, %v403
    %v406 = vrot.slane %v340, 6
    %v408 = vsel %vm152, %v250, %v406
    %v409 = vrot.slane %v309, 2
    %v411 = vsel %vm152, %v279, %v409
    %v413 = vsel %vm152, %v309, %v285
    %v414 = vrot.slane %v250, 2
    %v416 = vsel %vm152, %v340, %v414
    %v417 = vrot.slane %v221, 6
    %v419 = vsel %vm152, %v369, %v417
    %v420 = vrot.slane %v190, 2
    %v422 = vsel %vm152, %v398, %v420
    %vm423 = vcmask 1041408
    %v424 = vsel %vm423, %v402, %v405
    %vm425 = vcmask 1043456
    %v426 = vsel %vm425, %v424, %v408
    %vm427 = vcmask 1045504
    %v428 = vsel %vm427, %v426, %v411
    %v429 = vsel %vm423, %v413, %v416
    %v430 = vsel %vm425, %v429, %v419
    %v431 = vsel %vm427, %v430, %v422
    %v432 = vld [vmem:[#allocation9] sm:$0xff]
    %v433 = vld [vmem:[#allocation9 + $0x8] sm:$0xff]
    %v434 = vld [vmem:[#allocation9 + $0x10] sm:$0xff]
    %v435 = vld [vmem:[#allocation9 + $0x18] sm:$0xff]
    %v436 = vld [vmem:[#allocation9 + $0x20] sm:$0xff]
    %v437 = vld [vmem:[#allocation9 + $0x28] sm:$0xff]
    %v438 = vld [vmem:[#allocation9 + $0x30] sm:$0xff]
    %v439 = vld [vmem:[#allocation9 + $0x38] sm:$0xff]
    %v440 = vld [vmem:[%s5] sm:$0x1]
    %v442 = vperm.slane %v440, 0
    %v445 = vsel %vm165, %v428, 0
    %v448 = vsel %vm165, %v431, 0
    %450 = vmatpush.msra.mxu0 0.0
    %451 = vmatpush.msra.mxu0 0.0
    %452 = vmatpush.msra.mxu0 0.0
    %453 = vmatpush.msra.mxu0 0.0
    %454 = vmatpush.msra.mxu0 0.0
    %455 = vmatpush.msra.mxu0 0.0
    %456 = vmatpush.msra.mxu0 0.0
    %457 = vmatpush.msra.mxu0 0.0
    %458 = vmatpush.msra.mxu0 %v439
    %459 = vmatpush.msra.mxu0 %v438
    %460 = vmatpush.msra.mxu0 %v437
    %461 = vmatpush.msra.mxu0 %v436
    %462 = vmatpush.msra.mxu0 %v435
    %463 = vmatpush.msra.mxu0 %v434
    %464 = vmatpush.msra.mxu0 %v433
    %465 = vmatpush.msra.mxu0 %v432
    %466 = vmatmul.f32.gmra.mxu0 %v445
    %v467 = vpop.f32.mrf.mxu0
    %v468 = vadd.f32 %v442, %v467
    %469 = vmatmul.f32.gmra.mxu0 %v448
    %v470 = vpop.f32.mrf.mxu0
    %v471 = vadd.f32 %v442, %v470
    %472 = vdwg.mxu0
    %s473 = sld [smem:[#allocation2]]
    %vm474 = vcmp.gt.f32.partialorder %v468, 0.0
    %vm475 = vcmp.gt.f32.partialorder %v471, 0.0
    %v476 = vstv %s473
    %v477 = vmul.f32 %v476, %v468
    %v478 = vmul.f32 %v476, %v471
    %v479 = vsel %vm474, %v468, %v477
    %v480 = vsel %vm475, %v471, %v478
    %v481 = vld [vmem:[#allocation11] sm:$0xff]
    %v482 = vld [vmem:[#allocation11 + $0x8] sm:$0xff]
    %v483 = vld [vmem:[#allocation11 + $0x10] sm:$0xff]
    %v484 = vld [vmem:[#allocation11 + $0x18] sm:$0xff]
    %v485 = vld [vmem:[#allocation11 + $0x20] sm:$0xff]
    %v486 = vld [vmem:[#allocation11 + $0x28] sm:$0xff]
    %v487 = vld [vmem:[#allocation11 + $0x30] sm:$0xff]
    %v488 = vld [vmem:[#allocation11 + $0x38] sm:$0xff]
    %v489 = vld [vmem:[%s7] sm:$0x1]
    %v491 = vperm.slane %v489, 0
    %v494 = vsel %vm165, %v479, 0
    %v497 = vsel %vm165, %v480, 0
    %499 = vmatpush.msra.mxu0 0.0
    %500 = vmatpush.msra.mxu0 0.0
    %501 = vmatpush.msra.mxu0 0.0
    %502 = vmatpush.msra.mxu0 0.0
    %503 = vmatpush.msra.mxu0 0.0
    %504 = vmatpush.msra.mxu0 0.0
    %505 = vmatpush.msra.mxu0 0.0
    %506 = vmatpush.msra.mxu0 0.0
    %507 = vmatpush.msra.mxu0 %v488
    %508 = vmatpush.msra.mxu0 %v487
    %509 = vmatpush.msra.mxu0 %v486
    %510 = vmatpush.msra.mxu0 %v485
    %511 = vmatpush.msra.mxu0 %v484
    %512 = vmatpush.msra.mxu0 %v483
    %513 = vmatpush.msra.mxu0 %v482
    %514 = vmatpush.msra.mxu0 %v481
    %515 = vmatmul.f32.gmra.mxu0 %v494
    %v516 = vpop.f32.mrf.mxu0
    %v517 = vadd.f32 %v491, %v516
    %518 = vmatmul.f32.gmra.mxu0 %v497
    %v519 = vpop.f32.mrf.mxu0
    %v520 = vadd.f32 %v491, %v519
    %521 = vdwg.mxu0
    %522 = vst [vmem:[#allocation12] sm:$0xff] %v517
    %523 = vst [vmem:[#allocation12 + $0x8] sm:$0xff] %v520
    // Predicated region
    $region58: #{rnn_classifier_forward.1} parent=1 // pred_check
      _
    $region59: #{rnn_classifier_forward.1} parent=1 // pred_check_branch
      %525 = sbr.rel (0) target = $region61
    $region60: #{rnn_classifier_forward.1} parent=1 // pred_region
      %527 = vsyncadd [#allocation5], 0
      %s528 = sshll.u32 [#allocation12], 4
      %s529 = int_to_ptr.vmem [resolvable:$true] %s528
      %s530 = sshll.u32 %s9, 4
      %s531 = int_to_ptr.hbm [resolvable:$true] %s530
      %536 = dma.vmem_to_hbm [thread:$0]  %s529, 256, %s531, [#allocation5], 128, 128, 8
    $region61: #{rnn_classifier_forward.1} parent=1 // pred_fallthru
      _
    // Predicated region
    $region62: #{rnn_classifier_forward.1} parent=1 // pred_check
      _
    $region63: #{rnn_classifier_forward.1} parent=1 // pred_check_branch
      %538 = sbr.rel (0) target = $region65
    $region64: #{rnn_classifier_forward.1} parent=1 // pred_region
      %540 = dma.done [#allocation5], 256
    $region65: #{rnn_classifier_forward.1} parent=1 // pred_fallthru
      _
    %541 = vsyncpa [#allocation4], 1
    %542 = vsyncpa [#allocation7], 1
    %543 = vsyncpa [#allocation10], 1
    %544 = vsyncpa [#allocation5], 1

</llo_original>
